<compile_context>
chip_gen: v7x
topology: tpu7x:2x2x1
jax: 0.10.0
libtpu: 0.0.40
codegen_flags: <defaults>
</compile_context>

<pallas_src>
import functools

import jax
import jax.numpy as jnp
import numpy as np
from jax.experimental import pallas as pl
from jax.experimental.pallas import tpu as pltpu


# Keep HIGHEST unless the 1e-4 tolerance at the real C allows lowering it
# (the pass is HBM-bound, so this is a minor slot-pressure item).
_SPA_DOT_PRECISION = jax.lax.Precision.HIGHEST


# -----------------------------------------------------------------------------
# Fused per-image kernel: pool + excite + spatial SE + combine, x read once.
# -----------------------------------------------------------------------------
def _fused_kernel(x_ref, w1t_ref, b1_ref, w2_ref, b2_ref, ws_ref, o_ref, *, inv_hw):
    x = x_ref[0].astype(jnp.float32)                                   # (C, HW)

    # Global average pool.
    pooled = jnp.sum(x, axis=-1, keepdims=True) * inv_hw               # (C, 1)

    # fc1 (C -> Cr), ReLU, fc2 (Cr -> C), sigmoid — exact f32 broadcast-reduces.
    z1 = jnp.sum(w1t_ref[...] * pooled, axis=0, keepdims=True)         # (1, Cr)
    z1 = jnp.maximum(z1 + b1_ref[...], 0.0)
    z2 = jnp.sum(w2_ref[...] * z1, axis=-1, keepdims=True)             # (C, 1)
    chn_w = jax.nn.sigmoid(z2 + b2_ref[...])                           # (C, 1)

    # Spatial 1x1 conv (no bias): (1, C) @ (C, HW) on the MXU.
    spa = jnp.dot(ws_ref[...], x, preferred_element_type=jnp.float32,
                  precision=_SPA_DOT_PRECISION)                        # (1, HW)
    spa_w = jax.nn.sigmoid(spa)

    # Factored combine: chn_w*x + x*spa_w == x * (chn_w + spa_w).
    o_ref[0] = (x * (chn_w + spa_w)).astype(o_ref.dtype)


# -----------------------------------------------------------------------------
# Tiled fallback, pass 1: pure pooling (lane-dense accumulator).
# -----------------------------------------------------------------------------
def _pool_kernel(x_ref, psum_ref, acc_ref, *, lane_chunks):
    t = pl.program_id(1)

    @pl.when(t == 0)
    def _():
        acc_ref[...] = jnp.zeros_like(acc_ref)

    x = x_ref[0].astype(jnp.float32)                                   # (C, T)
    # Lane-dense VALU adds (no per-tile cross-lane reduce, no narrow stores).
    acc = acc_ref[...]
    for k in range(lane_chunks):                                       # static unroll
        acc = acc + x[:, k * 128:(k + 1) * 128]
    acc_ref[...] = acc

    @pl.when(t == pl.num_programs(1) - 1)
    def _():
        # Single cross-lane reduce + (C,1) store per image, off the hot path.
        psum_ref[0] = jnp.sum(acc_ref[...], axis=-1, keepdims=True)


# -----------------------------------------------------------------------------
# Tiled fallback, pass 2: spatial SE + combine (fully tiled / elementwise).
# -----------------------------------------------------------------------------
def _apply_kernel(chn_ref, ws_ref, x_ref, o_ref):
    x = x_ref[0].astype(jnp.float32)                                   # (C, T)
    spa = jnp.dot(ws_ref[...], x, preferred_element_type=jnp.float32,
                  precision=_SPA_DOT_PRECISION)                        # (1, T)
    spa_w = jax.nn.sigmoid(spa)
    chn_w = chn_ref[0].astype(jnp.float32)                             # (C, 1)
    o_ref[0] = (x * (chn_w + spa_w)).astype(o_ref.dtype)


# -----------------------------------------------------------------------------
# Wrapper helpers.
# -----------------------------------------------------------------------------
def _vmem_capacity_bytes():
    """Physical VMEM per core; conservative 64 MiB (v7x) if the query fails."""
    try:
        info_fn = getattr(pltpu, "get_tpu_info", None)
        if info_fn is not None:
            cap = getattr(info_fn(), "vmem_capacity_bytes", None)
            if cap:
                return int(cap)
    except Exception:
        pass
    return 64 * 1024 * 1024


def _pick_hw_tile(hw, c, itemsize, vmem_cap, *, max_lanes=8192):
    """Lane tile (multiple of 128) targeting ~2-8 MiB per (C, tile) buffer,
    scaled by physical VMEM (bigger on 128 MiB v5e/v6e, capped on 64 MiB v7x)."""
    target_bytes = max(2 << 20, min(8 << 20, vmem_cap // 16))
    lanes = target_bytes // max(1, c * itemsize)
    lanes = max(128, min(max_lanes, (lanes // 128) * 128))
    hw_ceil = -(-hw // 128) * 128
    return min(lanes, hw_ceil)


def scse_forward(x_nchw, w1, b1, w2, b2, ws, *, tile_hw=None, force_tiled=False):
    """x_nchw: (N,C,H,W); w1: (Cr,C); b1: (Cr,); w2: (C,Cr); b2: (C,); ws: (1,C)."""
    N, C, H, W = x_nchw.shape
    Cr = w1.shape[0]
    HW = H * W

    x = x_nchw.reshape(N, C, HW)
    dtype = x.dtype
    item_f32 = max(jnp.dtype(dtype).itemsize, 4)

    cap = _vmem_capacity_bytes()
    # Explicit limit above the scoped defaults but safely under physical VMEM.
    vmem_limit = min(int(cap * 0.8), 112 * 1024 * 1024)

    ws_row = jnp.asarray(ws).reshape(1, C)                             # (1, C)

    # ---- Fused per-image path: x read once, out written once. -------------
    slab_bytes = C * HW * item_f32
    use_fused = (not force_tiled) and (tile_hw is None) and (6 * slab_bytes <= vmem_limit)

    if use_fused:
        w1t = jnp.asarray(w1).T.reshape(C, Cr)                         # (C, Cr)
        b1_2d = jnp.asarray(b1).reshape(1, Cr)
        w2_2d = jnp.asarray(w2).reshape(C, Cr)
        b2_2d = jnp.asarray(b2).reshape(C, 1)

        out = pl.pallas_call(
            functools.partial(_fused_kernel, inv_hw=1.0 / HW),
            out_shape=jax.ShapeDtypeStruct((N, C, HW), dtype),
            grid_spec=pltpu.PrefetchScalarGridSpec(
                num_scalar_prefetch=0,
                grid=(N,),
                in_specs=[
                    pl.BlockSpec((1, C, HW), lambda n: (n, 0, 0)),
                    pl.BlockSpec((C, Cr), lambda n: (0, 0)),
                    pl.BlockSpec((1, Cr), lambda n: (0, 0)),
                    pl.BlockSpec((C, Cr), lambda n: (0, 0)),
                    pl.BlockSpec((C, 1), lambda n: (0, 0)),
                    pl.BlockSpec((1, C), lambda n: (0, 0)),
                ],
                out_specs=pl.BlockSpec((1, C, HW), lambda n: (n, 0, 0)),
            ),
            compiler_params=pltpu.CompilerParams(
                dimension_semantics=("parallel",),
                vmem_limit_bytes=vmem_limit,
            ),
        )(x, w1t, b1_2d, w2_2d, b2_2d, ws_row)
        return out.reshape(N, C, H, W)

    # ---- Tiled two-pass fallback (huge slabs). -----------------------------
    if tile_hw is None:
        tile_hw = _pick_hw_tile(HW, C, item_f32, cap)
    assert tile_hw % 128 == 0, f"tile_hw={tile_hw} must be a multiple of 128"

    # Pad HW up to a multiple of tile_hw: lane-dense, unmasked stores, bounded
    # VMEM even for non-128-divisible feature maps. Zero-padding is exact for
    # the sum pool and padded outputs are sliced off.
    # TODO(synk): a masked tail tile would avoid the extra pad copy of x.
    hw_pad = -(-HW // tile_hw) * tile_hw
    x_p = x if hw_pad == HW else jnp.pad(x, ((0, 0), (0, 0), (0, hw_pad - HW)))
    n_t = hw_pad // tile_hw

    # Pass 1: global-average-pool sums (FC tail pulled out to plain JAX).
    psum = pl.pallas_call(
        functools.partial(_pool_kernel, lane_chunks=tile_hw // 128),
        out_shape=jax.ShapeDtypeStruct((N, C, 1), jnp.float32),
        grid_spec=pltpu.PrefetchScalarGridSpec(
            num_scalar_prefetch=0,
            grid=(N, n_t),
            in_specs=[pl.BlockSpec((1, C, tile_hw), lambda n, t: (n, 0, t))],
            out_specs=pl.BlockSpec((1, C, 1), lambda n, t: (n, 0, 0)),
            scratch_shapes=[pltpu.VMEM((C, 128), jnp.float32)],
        ),
        compiler_params=pltpu.CompilerParams(
            dimension_semantics=("parallel", "arbitrary"),
            vmem_limit_bytes=vmem_limit,
        ),
    )(x_p)

    # Tiny channel-excitation FCs in plain JAX (once per image; negligible).
    hp = jax.lax.Precision.HIGHEST
    pooled = psum[:, :, 0] * (1.0 / HW)                                # (N, C)
    z1 = jax.nn.relu(jnp.dot(pooled, jnp.asarray(w1).T, precision=hp) + b1)
    chn = jax.nn.sigmoid(jnp.dot(z1, jnp.asarray(w2).T, precision=hp) + b2)
    chn_w = chn[:, :, None].astype(jnp.float32)                        # (N, C, 1)

    # Pass 2: tiled apply (spatial SE + factored combine).
    out_p = pl.pallas_call(
        _apply_kernel,
        out_shape=jax.ShapeDtypeStruct((N, C, hw_pad), dtype),
        grid_spec=pltpu.PrefetchScalarGridSpec(
            num_scalar_prefetch=0,
            grid=(N, n_t),
            in_specs=[
                pl.BlockSpec((1, C, 1), lambda n, t: (n, 0, 0)),
                pl.BlockSpec((1, C), lambda n, t: (0, 0)),
                pl.BlockSpec((1, C, tile_hw), lambda n, t: (n, 0, t)),
            ],
            out_specs=pl.BlockSpec((1, C, tile_hw), lambda n, t: (n, 0, t)),
        ),
        compiler_params=pltpu.CompilerParams(
            dimension_semantics=("parallel", "parallel"),
            vmem_limit_bytes=vmem_limit,
        ),
    )(chn_w, ws_row, x_p)

    out = out_p[:, :, :HW]
    return out.reshape(N, C, H, W)


def scse_reference(x, w1, b1, w2, b2, ws):
    """Pure-JAX reference mirroring the PyTorch SE forward."""
    hp = jax.lax.Precision.HIGHEST
    pooled = x.mean(axis=(2, 3))                                            # (N, C)
    z1 = jax.nn.relu(jnp.dot(pooled, w1.T, precision=hp) + b1)              # (N, Cr)
    chn_w = jax.nn.sigmoid(jnp.dot(z1, w2.T, precision=hp) + b2)            # (N, C)
    chn_se = chn_w[:, :, None, None] * x
    spa_w = jax.nn.sigmoid(jnp.einsum("nchw,c->nhw", x, ws[0], precision=hp))
    spa_se = x * spa_w[:, None, :, :]
    return chn_se + spa_se


if __name__ == "__main__":
    key = jax.random.PRNGKey(0)

    def make_params(k, C, reduction=16):
        Cr = max(1, C // reduction)
        k1, k2, k3, k4, k5 = jax.random.split(k, 5)
        w1 = jax.random.normal(k1, (Cr, C), jnp.float32) * 0.2   # fc1.weight (Cr,C,1,1) squeezed
        b1 = jax.random.normal(k2, (Cr,), jnp.float32) * 0.1     # fc1.bias
        w2 = jax.random.normal(k3, (C, Cr), jnp.float32) * 0.2   # fc2.weight (C,Cr,1,1) squeezed
        b2 = jax.random.normal(k4, (C,), jnp.float32) * 0.1      # fc2.bias
        ws = jax.random.normal(k5, (1, C), jnp.float32) * 0.2    # spatial 1x1 conv weight, no bias
        return w1, b1, w2, b2, ws

    kx1, kp1, kx2, kp2 = jax.random.split(key, 4)

    # Case 1: small slab -> fused per-image path; also force the tiled fallback
    # (two 128-lane tiles) on the same data.
    N, C, H, W = 2, 32, 16, 16
    x = jax.random.normal(kx1, (N, C, H, W), dtype=jnp.float32)
    p1 = make_params(kp1, C)
    ref1 = scse_reference(x, *p1)

    out_fused = jax.block_until_ready(scse_forward(x, *p1))
    np.testing.assert_allclose(np.asarray(out_fused), np.asarray(ref1), rtol=1e-4, atol=1e-4)

    out_tiled = jax.block_until_ready(scse_forward(x, *p1, force_tiled=True, tile_hw=128))
    np.testing.assert_allclose(np.asarray(out_tiled), np.asarray(ref1), rtol=1e-4, atol=1e-4)

    # Case 2: H*W not a multiple of 128 — fused path (full block, no padding)
    # and tiled fallback (padded to a lane-aligned tile).
    N2, C2, H2, W2 = 1, 32, 15, 15
    x2 = jax.random.normal(kx2, (N2, C2, H2, W2), dtype=jnp.float32)
    p2 = make_params(kp2, C2)
    ref2 = scse_reference(x2, *p2)

    out2_f = jax.block_until_ready(scse_forward(x2, *p2))
    np.testing.assert_allclose(np.asarray(out2_f), np.asarray(ref2), rtol=1e-4, atol=1e-4)

    out2_t = jax.block_until_ready(scse_forward(x2, *p2, force_tiled=True))
    np.testing.assert_allclose(np.asarray(out2_t), np.asarray(ref2), rtol=1e-4, atol=1e-4)

    print("KERNEL_OK")
</pallas_src>

<mosaic_0001>
module attributes {stable_mosaic.version = 11 : i64} {
  func.func @_fused_kernel(%arg0: i32, %arg1: memref<1x32x256xf32, #tpu.memory_space<vmem>>, %arg2: memref<32x2xf32, #tpu.memory_space<vmem>>, %arg3: memref<1x2xf32, #tpu.memory_space<vmem>>, %arg4: memref<32x2xf32, #tpu.memory_space<vmem>>, %arg5: memref<32x1xf32, #tpu.memory_space<vmem>>, %arg6: memref<1x32xf32, #tpu.memory_space<vmem>>, %arg7: memref<1x32x256xf32, #tpu.memory_space<vmem>>) attributes {dimension_semantics = [#tpu.dimension_semantics<parallel>], iteration_bounds = array<i64: 2>, scalar_prefetch = 0 : i64, scratch_operands = 0 : i64, tpu.core_type = #tpu.core_type<tc>, window_params = [{transform_indices = @transform_0, window_bounds = array<i64: 1, 32, 256>}, {pipeline_mode = #tpu.pipeline_mode<synchronous>, transform_indices = @transform_1, window_bounds = array<i64: 32, 2>}, {pipeline_mode = #tpu.pipeline_mode<synchronous>, transform_indices = @transform_2, window_bounds = array<i64: 1, 2>}, {pipeline_mode = #tpu.pipeline_mode<synchronous>, transform_indices = @transform_3, window_bounds = array<i64: 32, 2>}, {pipeline_mode = #tpu.pipeline_mode<synchronous>, transform_indices = @transform_4, window_bounds = array<i64: 32, 1>}, {pipeline_mode = #tpu.pipeline_mode<synchronous>, transform_indices = @transform_5, window_bounds = array<i64: 1, 32>}, {transform_indices = @transform_6, window_bounds = array<i64: 1, 32, 256>}]} {
    %c0 = arith.constant 0 : index
    %c0_0 = arith.constant 0 : index
    %c0_1 = arith.constant 0 : index
    %0 = vector.load %arg1[%c0, %c0_0, %c0_1] : memref<1x32x256xf32, #tpu.memory_space<vmem>>, vector<1x32x256xf32>
    %1 = vector.shape_cast %0 : vector<1x32x256xf32> to vector<32x256xf32>
    %cst = arith.constant dense<0.000000e+00> : vector<32xf32>
    %2 = vector.multi_reduction <add>, %1, %cst [1] : vector<32x256xf32> to vector<32xf32>
    %3 = vector.shape_cast %2 : vector<32xf32> to vector<32x1xf32>
    %cst_2 = arith.constant 3.906250e-03 : f32
    %4 = vector.broadcast %cst_2 : f32 to vector<32x1xf32>
    %5 = arith.mulf %3, %4 : vector<32x1xf32>
    %c0_3 = arith.constant 0 : index
    %c0_4 = arith.constant 0 : index
    %6 = vector.load %arg2[%c0_3, %c0_4] : memref<32x2xf32, #tpu.memory_space<vmem>>, vector<32x2xf32>
    %7 = vector.broadcast %5 : vector<32x1xf32> to vector<32x2xf32>
    %8 = arith.mulf %6, %7 : vector<32x2xf32>
    %cst_5 = arith.constant dense<0.000000e+00> : vector<2xf32>
    %9 = vector.multi_reduction <add>, %8, %cst_5 [0] : vector<32x2xf32> to vector<2xf32>
    %10 = vector.shape_cast %9 : vector<2xf32> to vector<1x2xf32>
    %c0_6 = arith.constant 0 : index
    %c0_7 = arith.constant 0 : index
    %11 = vector.load %arg3[%c0_6, %c0_7] : memref<1x2xf32, #tpu.memory_space<vmem>>, vector<1x2xf32>
    %12 = arith.addf %10, %11 : vector<1x2xf32>
    %cst_8 = arith.constant 0.000000e+00 : f32
    %13 = vector.broadcast %cst_8 : f32 to vector<1x2xf32>
    %14 = arith.maximumf %12, %13 : vector<1x2xf32>
    %c0_9 = arith.constant 0 : index
    %c0_10 = arith.constant 0 : index
    %15 = vector.load %arg4[%c0_9, %c0_10] : memref<32x2xf32, #tpu.memory_space<vmem>>, vector<32x2xf32>
    %16 = vector.broadcast %14 : vector<1x2xf32> to vector<32x2xf32>
    %17 = arith.mulf %15, %16 : vector<32x2xf32>
    %cst_11 = arith.constant dense<0.000000e+00> : vector<32xf32>
    %18 = vector.multi_reduction <add>, %17, %cst_11 [1] : vector<32x2xf32> to vector<32xf32>
    %19 = vector.shape_cast %18 : vector<32xf32> to vector<32x1xf32>
    %c0_12 = arith.constant 0 : index
    %c0_13 = arith.constant 0 : index
    %20 = vector.load %arg5[%c0_12, %c0_13] : memref<32x1xf32, #tpu.memory_space<vmem>>, vector<32x1xf32>
    %21 = arith.addf %19, %20 : vector<32x1xf32>
    %22 = arith.negf %21 : vector<32x1xf32>
    %23 = math.exp %22 : vector<32x1xf32>
    %cst_14 = arith.constant 1.000000e+00 : f32
    %24 = vector.broadcast %cst_14 : f32 to vector<32x1xf32>
    %25 = arith.addf %24, %23 : vector<32x1xf32>
    %26 = arith.divf %24, %25 : vector<32x1xf32>
    %c0_15 = arith.constant 0 : index
    %c0_16 = arith.constant 0 : index
    %27 = vector.load %arg6[%c0_15, %c0_16] : memref<1x32xf32, #tpu.memory_space<vmem>>, vector<1x32xf32>
    %cst_17 = arith.constant dense<0.000000e+00> : vector<1x256xf32>
    %28 = tpu.matmul %27, %1, %cst_17 {dimension_numbers = #tpu.dot_dimension_numbers<[1], [0], [0], [1], [0, 0, 1, 1], [], []>, precision = #tpu.contract_precision<fp32>} : vector<1x32xf32>, vector<32x256xf32>, vector<1x256xf32> -> vector<1x256xf32>
    %29 = arith.negf %28 : vector<1x256xf32>
    %30 = math.exp %29 : vector<1x256xf32>
    %cst_18 = arith.constant 1.000000e+00 : f32
    %31 = vector.broadcast %cst_18 : f32 to vector<1x256xf32>
    %32 = arith.addf %31, %30 : vector<1x256xf32>
    %33 = arith.divf %31, %32 : vector<1x256xf32>
    %34 = vector.broadcast %26 : vector<32x1xf32> to vector<32x256xf32>
    %35 = vector.broadcast %33 : vector<1x256xf32> to vector<32x256xf32>
    %36 = arith.addf %34, %35 : vector<32x256xf32>
    %37 = arith.mulf %1, %36 : vector<32x256xf32>
    %c0_19 = arith.constant 0 : index
    %c0_20 = arith.constant 0 : index
    %c0_21 = arith.constant 0 : index
    %38 = vector.load %arg7[%c0_19, %c0_20, %c0_21] : memref<1x32x256xf32, #tpu.memory_space<vmem>>, vector<1x32x256xf32>
    %39 = vector.shape_cast %38 : vector<1x32x256xf32> to vector<32x256xf32>
    %40 = vector.shape_cast %37 : vector<32x256xf32> to vector<1x32x256xf32>
    tpu.vector_store %arg7[%c0_19, %c0_20, %c0_21], %40 {strides = array<i32>} : memref<1x32x256xf32, #tpu.memory_space<vmem>>, vector<1x32x256xf32>,
    return
  }
  func.func @transform_0(%arg0: i32) -> (i32, i32, i32) {
    %c0_i32 = arith.constant 0 : i32
    %c0_i32_0 = arith.constant 0 : i32
    %c0_i32_1 = arith.constant 0 : i32
    return %arg0, %c0_i32, %c0_i32_0 : i32, i32, i32
  }
  func.func @transform_1(%arg0: i32) -> (i32, i32) {
    %c0_i32 = arith.constant 0 : i32
    %c0_i32_0 = arith.constant 0 : i32
    %c0_i32_1 = arith.constant 0 : i32
    return %c0_i32, %c0_i32_0 : i32, i32
  }
  func.func @transform_2(%arg0: i32) -> (i32, i32) {
    %c0_i32 = arith.constant 0 : i32
    %c0_i32_0 = arith.constant 0 : i32
    %c0_i32_1 = arith.constant 0 : i32
    return %c0_i32, %c0_i32_0 : i32, i32
  }
  func.func @transform_3(%arg0: i32) -> (i32, i32) {
    %c0_i32 = arith.constant 0 : i32
    %c0_i32_0 = arith.constant 0 : i32
    %c0_i32_1 = arith.constant 0 : i32
    return %c0_i32, %c0_i32_0 : i32, i32
  }
  func.func @transform_4(%arg0: i32) -> (i32, i32) {
    %c0_i32 = arith.constant 0 : i32
    %c0_i32_0 = arith.constant 0 : i32
    %c0_i32_1 = arith.constant 0 : i32
    return %c0_i32, %c0_i32_0 : i32, i32
  }
  func.func @transform_5(%arg0: i32) -> (i32, i32) {
    %c0_i32 = arith.constant 0 : i32
    %c0_i32_0 = arith.constant 0 : i32
    %c0_i32_1 = arith.constant 0 : i32
    return %c0_i32, %c0_i32_0 : i32, i32
  }
  func.func @transform_6(%arg0: i32) -> (i32, i32, i32) {
    %c0_i32 = arith.constant 0 : i32
    %c0_i32_0 = arith.constant 0 : i32
    %c0_i32_1 = arith.constant 0 : i32
    return %arg0, %c0_i32, %c0_i32_0 : i32, i32, i32
  }
}

</mosaic_0001>

<llo_original>
// kernel: tpu_custom_call.1
$region0: #{tpu_custom_call.1}
  #allocation0 [shape = 'u32[]', space=smem, size = 0x4, offset = 0x4, fixed_abs, tag = 'smem constant byte address 0x4 - core index']
  #allocation1 [shape = 'u32[144,128]{1,0:T(1,128)}', space=vmem, size = 0x12000, scoped, tag = 'internal scratch']
  %s0 = inlined_call_operand.hbm [shape: f32[2,32,256], index: 0, kind: input, shape index: {}]
  %s1 = inlined_call_operand.vmem [shape: f32[32,2], index: 1, kind: input, shape index: {}]
  %s2 = inlined_call_operand.vmem [shape: f32[1,2], index: 2, kind: input, shape index: {}]
  %s3 = inlined_call_operand.vmem [shape: f32[32,2], index: 3, kind: input, shape index: {}]
  %s4 = inlined_call_operand.vmem [shape: f32[32,1], index: 4, kind: input, shape index: {}]
  %s5 = inlined_call_operand.vmem [shape: f32[1,32], index: 5, kind: input, shape index: {}]
  %s6 = inlined_call_operand.hbm [shape: f32[2,32,256], index: 6, kind: output, shape index: {}]
  %s7 = sld [smem:[#allocation0]]
  $region61: #{tpu_custom_call.1} parent=0
    _
  %s9 = ssub.s32 1, %s7
  %s10 = scalar_select 0, %s9, %s7
  $region1: #{tpu_custom_call.1} parent=0
    #allocation2 [shape = 'u8[65536]{0}', space=vmem, size = 0x10000, scoped, tag = 'input window, operand 0']
    #allocation3 [shape = 's32[2]{0}', space=sflag, size = 0x8, scoped, tag = 'scoped memory for tpu_custom_call.1']
    #allocation4 [shape = 's32[2]{0}', space=sflag, size = 0x8, scoped, tag = 'scoped memory for tpu_custom_call.1']
    #allocation5 [shape = 'u8[65536]{0}', space=vmem, size = 0x10000, scoped, tag = 'output window, operand 0']
    %11 = vsyncpa [#allocation3], 0
    %s12 = scalar_lea.sflag [#allocation3], 1
    %13 = vsyncpa %s12, 0
    %14 = vsyncpa [#allocation4], 0
    %s15 = scalar_lea.sflag [#allocation4], 1
    %16 = vsyncpa %s15, 0
    loop: start=0, step=1, limit=4
    $region2: #{tpu_custom_call.1} parent=1 // loop_pre_header
      _
    $region3: #{tpu_custom_call.1} parent=1 // loop_header
      %s18 = sphi 0, %s22
      %p19 = scmp.ge.s32.totalorder %s18, 4
      %s28 = sphi 0, %s30
      %s31 = sphi 0, %s28
      %s32 = sphi 0, %s31
      %s48 = sphi 0, %s32
      %s52 = sphi 0, %s52
      %s54 = sphi 0, %s52
      %s55 = sphi 0, %s54
      %s69 = sphi 0, %s55
      %s73 = sphi 0, %s73
      %s75 = sphi 0, %s73
      %s76 = sphi 0, %s75
      %s90 = sphi 0, %s76
      %s94 = sphi 0, %s94
      %s96 = sphi 0, %s94
      %s97 = sphi 0, %s96
      %s111 = sphi 0, %s97
      %s115 = sphi 0, %s115
      %s117 = sphi 0, %s115
      %s118 = sphi 0, %s117
      %s132 = sphi 0, %s118
      %s136 = sphi 0, %s136
      %s138 = sphi 0, %s136
      %s139 = sphi 0, %s138
      %s153 = sphi 0, %s139
      %s159 = sphi 0, %s161
      %s162 = sphi 0, %s159
      %s163 = sphi 0, %s162
      %s179 = sphi 0, %s163
    $region4: #{tpu_custom_call.1} parent=1 // loop_header_branch
      %21 = sbr.rel (%p19) target = $region8
    $region5: #{tpu_custom_call.1} parent=1 // loop_body
      %s23 = ssub.s32 %s18, 1
      %s24 = ssub.s32 %s18, 2
      %s25 = sadd.s32 %s18, 1
      %s26 = ssub.s32 %s18, %s25
      %p27 = scmp.eq.s32.totalorder %s26, 0
      %s29 = sadd.s32 %s28, 1
      %s30 = scalar_select %p27, %s28, %s29
      %p33 = pneg %p27
      %p34 = scmp.eq.s32.totalorder %s18, 1
      %p35 = por %p33, %p34
      %p36 = scmp.ne.s32.totalorder %s28, %s31
      %p37 = scmp.eq.s32.totalorder %s18, 0
      %p38 = por %p36, %p37
      %p39 = scmp.ne.s32.totalorder %s28, %s31
      %p40 = scmp.eq.s32.totalorder %s23, 1
      %p41 = por %p39, %p40
      %p42 = scmp.ne.s32.totalorder %s31, %s32
      %p43 = scmp.eq.s32.totalorder %s23, 0
      %p44 = por %p42, %p43
      %p45 = scmp.ne.s32.totalorder %s31, %s32
      %p46 = scmp.eq.s32.totalorder %s24, 1
      %p47 = por %p45, %p46
      %p49 = scmp.ne.s32.totalorder %s32, %s48
      %p50 = scmp.eq.s32.totalorder %s24, 0
      %p51 = por %p49, %p50
      %s53 = sadd.s32 %s52, 1
      %p56 = scmp.eq.s32.totalorder %s18, 1
      %p57 = scmp.ne.s32.totalorder %s52, %s54
      %p58 = scmp.eq.s32.totalorder %s18, 0
      %p59 = por %p57, %p58
      %p60 = scmp.ne.s32.totalorder %s52, %s54
      %p61 = scmp.eq.s32.totalorder %s23, 1
      %p62 = por %p60, %p61
      %p63 = scmp.ne.s32.totalorder %s54, %s55
      %p64 = scmp.eq.s32.totalorder %s23, 0
      %p65 = por %p63, %p64
      %p66 = scmp.ne.s32.totalorder %s54, %s55
      %p67 = scmp.eq.s32.totalorder %s24, 1
      %p68 = por %p66, %p67
      %p70 = scmp.ne.s32.totalorder %s55, %s69
      %p71 = scmp.eq.s32.totalorder %s24, 0
      %p72 = por %p70, %p71
      %s74 = sadd.s32 %s73, 1
      %p77 = scmp.eq.s32.totalorder %s18, 1
      %p78 = scmp.ne.s32.totalorder %s73, %s75
      %p79 = scmp.eq.s32.totalorder %s18, 0
      %p80 = por %p78, %p79
      %p81 = scmp.ne.s32.totalorder %s73, %s75
      %p82 = scmp.eq.s32.totalorder %s23, 1
      %p83 = por %p81, %p82
      %p84 = scmp.ne.s32.totalorder %s75, %s76
      %p85 = scmp.eq.s32.totalorder %s23, 0
      %p86 = por %p84, %p85
      %p87 = scmp.ne.s32.totalorder %s75, %s76
      %p88 = scmp.eq.s32.totalorder %s24, 1
      %p89 = por %p87, %p88
      %p91 = scmp.ne.s32.totalorder %s76, %s90
      %p92 = scmp.eq.s32.totalorder %s24, 0
      %p93 = por %p91, %p92
      %s95 = sadd.s32 %s94, 1
      %p98 = scmp.eq.s32.totalorder %s18, 1
      %p99 = scmp.ne.s32.totalorder %s94, %s96
      %p100 = scmp.eq.s32.totalorder %s18, 0
      %p101 = por %p99, %p100
      %p102 = scmp.ne.s32.totalorder %s94, %s96
      %p103 = scmp.eq.s32.totalorder %s23, 1
      %p104 = por %p102, %p103
      %p105 = scmp.ne.s32.totalorder %s96, %s97
      %p106 = scmp.eq.s32.totalorder %s23, 0
      %p107 = por %p105, %p106
      %p108 = scmp.ne.s32.totalorder %s96, %s97
      %p109 = scmp.eq.s32.totalorder %s24, 1
      %p110 = por %p108, %p109
      %p112 = scmp.ne.s32.totalorder %s97, %s111
      %p113 = scmp.eq.s32.totalorder %s24, 0
      %p114 = por %p112, %p113
      %s116 = sadd.s32 %s115, 1
      %p119 = scmp.eq.s32.totalorder %s18, 1
      %p120 = scmp.ne.s32.totalorder %s115, %s117
      %p121 = scmp.eq.s32.totalorder %s18, 0
      %p122 = por %p120, %p121
      %p123 = scmp.ne.s32.totalorder %s115, %s117
      %p124 = scmp.eq.s32.totalorder %s23, 1
      %p125 = por %p123, %p124
      %p126 = scmp.ne.s32.totalorder %s117, %s118
      %p127 = scmp.eq.s32.totalorder %s23, 0
      %p128 = por %p126, %p127
      %p129 = scmp.ne.s32.totalorder %s117, %s118
      %p130 = scmp.eq.s32.totalorder %s24, 1
      %p131 = por %p129, %p130
      %p133 = scmp.ne.s32.totalorder %s118, %s132
      %p134 = scmp.eq.s32.totalorder %s24, 0
      %p135 = por %p133, %p134
      %s137 = sadd.s32 %s136, 1
      %p140 = scmp.eq.s32.totalorder %s18, 1
      %p141 = scmp.ne.s32.totalorder %s136, %s138
      %p142 = scmp.eq.s32.totalorder %s18, 0
      %p143 = por %p141, %p142
      %p144 = scmp.ne.s32.totalorder %s136, %s138
      %p145 = scmp.eq.s32.totalorder %s23, 1
      %p146 = por %p144, %p145
      %p147 = scmp.ne.s32.totalorder %s138, %s139
      %p148 = scmp.eq.s32.totalorder %s23, 0
      %p149 = por %p147, %p148
      %p150 = scmp.ne.s32.totalorder %s138, %s139
      %p151 = scmp.eq.s32.totalorder %s24, 1
      %p152 = por %p150, %p151
      %p154 = scmp.ne.s32.totalorder %s139, %s153
      %p155 = scmp.eq.s32.totalorder %s24, 0
      %p156 = por %p154, %p155
      %s157 = ssub.s32 %s18, %s25
      %p158 = scmp.eq.s32.totalorder %s157, 0
      %s160 = sadd.s32 %s159, 1
      %s161 = scalar_select %p158, %s159, %s160
      %p164 = pneg %p158
      %p165 = scmp.eq.s32.totalorder %s18, 1
      %p166 = por %p164, %p165
      %p167 = scmp.ne.s32.totalorder %s159, %s162
      %p168 = scmp.eq.s32.totalorder %s18, 0
      %p169 = por %p167, %p168
      %p170 = scmp.ne.s32.totalorder %s159, %s162
      %p171 = scmp.eq.s32.totalorder %s23, 1
      %p172 = por %p170, %p171
      %p173 = scmp.ne.s32.totalorder %s162, %s163
      %p174 = scmp.eq.s32.totalorder %s23, 0
      %p175 = por %p173, %p174
      %p176 = scmp.ne.s32.totalorder %s162, %s163
      %p177 = scmp.eq.s32.totalorder %s24, 1
      %p178 = por %p176, %p177
      %p180 = scmp.ne.s32.totalorder %s163, %s179
      %p181 = scmp.eq.s32.totalorder %s24, 0
      %p182 = por %p180, %p181
      %p183 = scmp.le.s32.totalorder 1, %s18
      %p184 = scmp.lt.s32.totalorder %s18, 3
      %p185 = pnand %p183, %p184
      %p186 = pneg %p185
      // Predicated region
      $region9: #{tpu_custom_call.1} parent=5 // pred_check
        _
      $region10: #{tpu_custom_call.1} parent=5 // pred_check_branch
        %188 = sbr.rel (%p185) target = $region12
      $region11: #{tpu_custom_call.1} parent=5 // pred_region
        %s189 = ssub.s32 %s18, 1
        // Predicated region
        $region13: #{tpu_custom_call.1} parent=11 // pred_check
          %p190 = pneg %p65
        $region14: #{tpu_custom_call.1} parent=11 // pred_check_branch
          %192 = sbr.rel (%p190) target = $region16
        $region15: #{tpu_custom_call.1} parent=11 // pred_region
          _
        $region16: #{tpu_custom_call.1} parent=11 // pred_fallthru
          _
        // Predicated region
        $region17: #{tpu_custom_call.1} parent=11 // pred_check
          %p193 = pneg %p86
        $region18: #{tpu_custom_call.1} parent=11 // pred_check_branch
          %195 = sbr.rel (%p193) target = $region20
        $region19: #{tpu_custom_call.1} parent=11 // pred_region
          _
        $region20: #{tpu_custom_call.1} parent=11 // pred_fallthru
          _
        // Predicated region
        $region21: #{tpu_custom_call.1} parent=11 // pred_check
          %p196 = pneg %p107
        $region22: #{tpu_custom_call.1} parent=11 // pred_check_branch
          %198 = sbr.rel (%p196) target = $region24
        $region23: #{tpu_custom_call.1} parent=11 // pred_region
          _
        $region24: #{tpu_custom_call.1} parent=11 // pred_fallthru
          _
        // Predicated region
        $region25: #{tpu_custom_call.1} parent=11 // pred_check
          %p199 = pneg %p128
        $region26: #{tpu_custom_call.1} parent=11 // pred_check_branch
          %201 = sbr.rel (%p199) target = $region28
        $region27: #{tpu_custom_call.1} parent=11 // pred_region
          _
        $region28: #{tpu_custom_call.1} parent=11 // pred_fallthru
          _
        // Predicated region
        $region29: #{tpu_custom_call.1} parent=11 // pred_check
          %p202 = pneg %p149
        $region30: #{tpu_custom_call.1} parent=11 // pred_check_branch
          %204 = sbr.rel (%p202) target = $region32
        $region31: #{tpu_custom_call.1} parent=11 // pred_region
          _
        $region32: #{tpu_custom_call.1} parent=11 // pred_fallthru
          _
      $region12: #{tpu_custom_call.1} parent=5 // pred_fallthru
        _
      %p205 = scmp.lt.s32.totalorder %s18, 2
      // Predicated region
      $region33: #{tpu_custom_call.1} parent=5 // pred_check
        %p206 = pneg %p205
      $region34: #{tpu_custom_call.1} parent=5 // pred_check_branch
        %208 = sbr.rel (%p206) target = $region36
      $region35: #{tpu_custom_call.1} parent=5 // pred_region
        // Predicated region
        $region37: #{tpu_custom_call.1} parent=35 // pred_check
          %p209 = pneg %p38
        $region38: #{tpu_custom_call.1} parent=35 // pred_check_branch
          %211 = sbr.rel (%p209) target = $region40
        $region39: #{tpu_custom_call.1} parent=35 // pred_region
          %s212 = sand.u32 %s28, 1
          %s213 = scalar_lea.sflag [#allocation3], %s212
          %s214 = sand.u32 %s28, 1
          %s215 = smul.addr %s214, 64
          %s216 = scalar_lea.vmem [#allocation2], %s215
          %s218 = ssub.s32 1024, 1024
          %219 = vsyncadd %s213, %s218
          %s220 = smul.addr %s18, 8
          %s221 = smul.addr %s220, 128
          %s222 = scalar_lea.hbm %s0, %s221
          %s223 = sshll.u32 %s216, 4
          %s224 = int_to_ptr.vmem [resolvable:$true] %s223
          %229 = dma.hbm_to_vmem [thread:$0]  %s222, 1024, %s224, %s213, 256, 256, 16
        $region40: #{tpu_custom_call.1} parent=35 // pred_fallthru
          _
      $region36: #{tpu_custom_call.1} parent=5 // pred_fallthru
        _
      %p230 = scmp.le.s32.totalorder 1, %s18
      %p231 = scmp.lt.s32.totalorder %s18, 3
      %p232 = pnand %p230, %p231
      %p233 = pneg %p232
      // Predicated region
      $region41: #{tpu_custom_call.1} parent=5 // pred_check
        _
      $region42: #{tpu_custom_call.1} parent=5 // pred_check_branch
        %235 = sbr.rel (%p232) target = $region44
      $region43: #{tpu_custom_call.1} parent=5 // pred_region
        %s236 = ssub.s32 %s18, 1
        %s237 = sand.u32 %s31, 1
        %s238 = scalar_lea.sflag [#allocation3], %s237
        %s239 = sand.u32 %s31, 1
        %s240 = smul.addr %s239, 64
        %s241 = scalar_lea.vmem [#allocation2], %s240
        // Predicated region
        $region45: #{tpu_custom_call.1} parent=43 // pred_check
          %p242 = pneg %p44
        $region46: #{tpu_custom_call.1} parent=43 // pred_check_branch
          %244 = sbr.rel (%p242) target = $region48
        $region47: #{tpu_custom_call.1} parent=43 // pred_region
          %245 = dma.done %s238, 1024
        $region48: #{tpu_custom_call.1} parent=43 // pred_fallthru
          _
        %s246 = sand.u32 %s31, 1
        %s247 = scalar_lea.sflag [#allocation3], %s246
        %s248 = sand.u32 %s31, 1
        %s249 = smul.addr %s248, 64
        %s250 = scalar_lea.vmem [#allocation2], %s249
        %p251 = pneg %p44
        %p252 = pneg %p41
        %p253 = pneg %p65
        %p254 = pneg %p62
        %p255 = pneg %p86
        %p256 = pneg %p83
        %p257 = pneg %p107
        %p258 = pneg %p104
        %p259 = pneg %p128
        %p260 = pneg %p125
        %p261 = pneg %p149
        %p262 = pneg %p146
        %p263 = pneg %p175
        %p264 = pneg %p172
        %s265 = sand.u32 %s162, 1
        %s266 = scalar_lea.sflag [#allocation4], %s265
        %s267 = sand.u32 %s162, 1
        %s268 = smul.addr %s267, 64
        %s269 = scalar_lea.vmem [#allocation5], %s268
        %v270 = vld [vmem:[%s241] sm:$0xff]
        %v271 = vld [vmem:[%s241 + $0x8] sm:$0xff]
        %v272 = vld [vmem:[%s241 + $0x10] sm:$0xff]
        %v273 = vld [vmem:[%s241 + $0x18] sm:$0xff]
        %v274 = vld [vmem:[%s241 + $0x20] sm:$0xff]
        %v275 = vld [vmem:[%s241 + $0x28] sm:$0xff]
        %v276 = vld [vmem:[%s241 + $0x30] sm:$0xff]
        %v277 = vld [vmem:[%s241 + $0x38] sm:$0xff]
        %v278 = vadd.f32 %v270, %v271
        %279 = vadd.xlane.f32.xlu0 %v278
        %v280 = vpop.xlane.xlu0 %279
        %v281 = vadd.f32 %v272, %v273
        %282 = vadd.xlane.f32.xlu0 %v281
        %v283 = vpop.xlane.xlu0 %282
        %v284 = vadd.f32 %v274, %v275
        %285 = vadd.xlane.f32.xlu0 %v284
        %v286 = vpop.xlane.xlu0 %285
        %v287 = vadd.f32 %v276, %v277
        %288 = vadd.xlane.f32.xlu0 %v287
        %v289 = vpop.xlane.xlu0 %288
        %v290 = vmul.f32 %v280, 0.00390625
        %v291 = vmul.f32 %v283, 0.00390625
        %v292 = vmul.f32 %v286, 0.00390625
        %v293 = vmul.f32 %v289, 0.00390625
        %v294 = vld [vmem:[%s1] sm:$0xff]
        %v295 = vld [vmem:[%s1 + $0x8] sm:$0xff]
        %v296 = vld [vmem:[%s1 + $0x10] sm:$0xff]
        %v297 = vld [vmem:[%s1 + $0x18] sm:$0xff]
        %v298 = vmul.f32 %v294, %v290
        %v299 = vmul.f32 %v295, %v291
        %v300 = vmul.f32 %v296, %v292
        %v301 = vmul.f32 %v297, %v293
        %vm302 = vcmask 15360
        %v303 = vsel %vm302, %v298, 0.0
        %v304 = vsel %vm302, %v299, 0.0
        %v305 = vadd.f32 %v303, %v304
        %v306 = vsel %vm302, %v300, 0.0
        %v307 = vadd.f32 %v305, %v306
        %v308 = vsel %vm302, %v301, 0.0
        %v309 = vadd.f32 %v307, %v308
        %v310 = vrot.slane %v309, 4
        %v311 = vadd.f32 %v309, %v310
        %v312 = vrot.slane %v311, 2
        %v313 = vadd.f32 %v311, %v312
        %v314 = vrot.slane %v313, 1
        %v315 = vadd.f32 %v313, %v314
        %v316 = vld [vmem:[%s2] sm:$0x1]
        %v317 = vadd.f32 %v315, %v316
        %v318 = vmax.f32 %v317, 0.0
        %v319 = vld [vmem:[%s3] sm:$0xff]
        %v320 = vld [vmem:[%s3 + $0x8] sm:$0xff]
        %v321 = vld [vmem:[%s3 + $0x10] sm:$0xff]
        %v322 = vld [vmem:[%s3 + $0x18] sm:$0xff]
        %v323 = vlaneseq
        %v324 = vshrl.u32 %v323, 7
        %v325 = vsub.s32 0, %v324
        %v326 = vrot.slane %v318, %v325
        %v327 = vmul.f32 %v319, %v326
        %v328 = vmul.f32 %v320, %v326
        %v329 = vmul.f32 %v321, %v326
        %v330 = vmul.f32 %v322, %v326
        %v331 = vsel %vm302, %v327, 0.0
        %332 = vadd.xlane.f32.xlu0 %v331
        %v333 = vpop.xlane.xlu0 %332
        %v334 = vsel %vm302, %v328, 0.0
        %335 = vadd.xlane.f32.xlu0 %v334
        %v336 = vpop.xlane.xlu0 %335
        %v337 = vsel %vm302, %v329, 0.0
        %338 = vadd.xlane.f32.xlu0 %v337
        %v339 = vpop.xlane.xlu0 %338
        %v340 = vsel %vm302, %v330, 0.0
        %341 = vadd.xlane.f32.xlu0 %v340
        %v342 = vpop.xlane.xlu0 %341
        %v343 = vld [vmem:[%s4] sm:$0xff]
        %v344 = vld [vmem:[%s4 + $0x8] sm:$0xff]
        %v345 = vld [vmem:[%s4 + $0x10] sm:$0xff]
        %v346 = vld [vmem:[%s4 + $0x18] sm:$0xff]
        %v347 = vadd.f32 %v333, %v343
        %v348 = vadd.f32 %v336, %v344
        %v349 = vadd.f32 %v339, %v345
        %v350 = vadd.f32 %v342, %v346
        %v351 = vxor.u32 %v347, 2147483648
        %v352 = vxor.u32 %v348, 2147483648
        %v353 = vxor.u32 %v349, 2147483648
        %v354 = vxor.u32 %v350, 2147483648
        %v355 = vmul.f32 %v351, 1.442695
        %v356 = vpow.pop %v355
        %v357 = vmul.f32 %v352, 1.442695
        %v358 = vpow.pop %v357
        %v359 = vmul.f32 %v353, 1.442695
        %v360 = vpow.pop %v359
        %v361 = vmul.f32 %v354, 1.442695
        %v362 = vpow.pop %v361
        %v363 = vadd.f32 %v356, 1.0
        %v364 = vadd.f32 %v358, 1.0
        %v365 = vadd.f32 %v360, 1.0
        %v366 = vadd.f32 %v362, 1.0
        %v367 = vrcp.pop %v363
        %v368 = vmul.f32 1.0, %v367
        %v369 = vrcp.pop %v364
        %v370 = vmul.f32 1.0, %v369
        %v371 = vrcp.pop %v365
        %v372 = vmul.f32 1.0, %v371
        %v373 = vrcp.pop %v366
        %v374 = vmul.f32 1.0, %v373
        %v375 = vld [vmem:[%s5] sm:$0x1]
        %vm376 = vcmask 261120
        %v378 = vsel %vm376, %v375, 0
        %v380 = vand.u32 %v271, 4294901760
        %381 = vmatprep.subr.mxu0 %v380
        %v382 = vand.u32 %v270, 4294901760
        %383 = vmatpush1.msra.mxu0 %v382
        %v384 = vand.u32 %v273, 4294901760
        %385 = vmatprep.subr.mxu0 %v384
        %v386 = vand.u32 %v272, 4294901760
        %387 = vmatpush1.msra.mxu0 %v386
        %v388 = vand.u32 %v275, 4294901760
        %389 = vmatprep.subr.mxu0 %v388
        %v390 = vand.u32 %v274, 4294901760
        %391 = vmatpush1.msra.mxu0 %v390
        %v392 = vand.u32 %v277, 4294901760
        %393 = vmatprep.subr.mxu0 %v392
        %v394 = vand.u32 %v276, 4294901760
        %395 = vmatpush1.msra.mxu0 %v394
        %396 = vmatprep.subr.mxu0 0.0
        %397 = vmatpush1.msra.mxu0 0.0
        %398 = vmatprep.subr.mxu0 0.0
        %399 = vmatpush1.msra.mxu0 0.0
        %400 = vmatprep.subr.mxu0 0.0
        %401 = vmatpush1.msra.mxu0 0.0
        %402 = vmatprep.subr.mxu0 0.0
        %403 = vmatpush1.msra.mxu0 0.0
        %404 = vmatprep.subr.mxu0 0.0
        %405 = vmatpush1.msra.mxu0 0.0
        %406 = vmatprep.subr.mxu0 0.0
        %407 = vmatpush1.msra.mxu0 0.0
        %408 = vmatprep.subr.mxu0 0.0
        %409 = vmatpush1.msra.mxu0 0.0
        %410 = vmatprep.subr.mxu0 0.0
        %411 = vmatpush1.msra.mxu0 0.0
        %412 = vmatprep.subr.mxu0 0.0
        %413 = vmatpush1.msra.mxu0 0.0
        %414 = vmatprep.subr.mxu0 0.0
        %415 = vmatpush1.msra.mxu0 0.0
        %416 = vmatprep.subr.mxu0 0.0
        %417 = vmatpush1.msra.mxu0 0.0
        %418 = vmatprep.subr.mxu0 0.0
        %419 = vmatpush1.msra.mxu0 0.0
        %420 = vmatprep.subr.mxu0 0.0
        %421 = vmatpush1.msra.mxu0 0.0
        %422 = vmatprep.subr.mxu0 0.0
        %423 = vmatpush1.msra.mxu0 0.0
        %424 = vmatprep.subr.mxu0 0.0
        %425 = vmatpush1.msra.mxu0 0.0
        %426 = vmatprep.subr.mxu0 0.0
        %427 = vmatpush1.msra.mxu0 0.0
        %428 = vmatprep.subr.mxu0 0.0
        %429 = vmatpush1.msra.mxu0 0.0
        %430 = vmatprep.subr.mxu0 0.0
        %431 = vmatpush1.msra.mxu0 0.0
        %432 = vmatprep.subr.mxu0 0.0
        %433 = vmatpush1.msra.mxu0 0.0
        %434 = vmatprep.subr.mxu0 0.0
        %435 = vmatpush1.msra.mxu0 0.0
        %436 = vmatprep.subr.mxu0 0.0
        %437 = vmatpush1.msra.mxu0 0.0
        %438 = vmatprep.subr.mxu0 0.0
        %439 = vmatpush1.msra.mxu0 0.0
        %440 = vmatprep.subr.mxu0 0.0
        %441 = vmatpush1.msra.mxu0 0.0
        %442 = vmatprep.subr.mxu0 0.0
        %443 = vmatpush1.msra.mxu0 0.0
        %444 = vmatprep.subr.mxu0 0.0
        %445 = vmatpush1.msra.mxu0 0.0
        %446 = vmatprep.subr.mxu0 0.0
        %447 = vmatpush1.msra.mxu0 0.0
        %448 = vmatprep.subr.mxu0 0.0
        %449 = vmatpush1.msra.mxu0 0.0
        %450 = vmatprep.subr.mxu0 0.0
        %451 = vmatpush1.msra.mxu0 0.0
        %452 = vmatprep.mubr.f32.mxu0 0.0
        %v453 = vand.u32 %v378, 4294901760
        %v454 = vsub.f32 %v378, %v453
        %v455 = vand.u32 %v454, 4294901760
        %v456 = vsub.f32 %v454, %v455
        %v457 = vand.u32 %v456, 4294901760
        %458 = vmatmul.mubr.f32.gmra.mrb[0].mxu0 %v457
        %v459 = vpop.f32.mrb[0].mxu0
        %v460 = vadd.f32 0.0, %v459
        %v461 = vpop.f32.mrb[0].mxu0
        %v462 = vadd.f32 0.0, %v461
        %463 = vdwg.mxu0
        %v464 = vand.u32 %v271, 4294901760
        %v465 = vsub.f32 %v271, %v464
        %v466 = vand.u32 %v465, 4294901760
        %v467 = vsub.f32 %v465, %v466
        %v468 = vand.u32 %v467, 4294901760
        %469 = vmatprep.subr.mxu0 %v468
        %v470 = vand.u32 %v270, 4294901760
        %v471 = vsub.f32 %v270, %v470
        %v472 = vand.u32 %v471, 4294901760
        %v473 = vsub.f32 %v471, %v472
        %v474 = vand.u32 %v473, 4294901760
        %475 = vmatpush1.msra.mxu0 %v474
        %v476 = vand.u32 %v273, 4294901760
        %v477 = vsub.f32 %v273, %v476
        %v478 = vand.u32 %v477, 4294901760
        %v479 = vsub.f32 %v477, %v478
        %v480 = vand.u32 %v479, 4294901760
        %481 = vmatprep.subr.mxu0 %v480
        %v482 = vand.u32 %v272, 4294901760
        %v483 = vsub.f32 %v272, %v482
        %v484 = vand.u32 %v483, 4294901760
        %v485 = vsub.f32 %v483, %v484
        %v486 = vand.u32 %v485, 4294901760
        %487 = vmatpush1.msra.mxu0 %v486
        %v488 = vand.u32 %v275, 4294901760
        %v489 = vsub.f32 %v275, %v488
        %v490 = vand.u32 %v489, 4294901760
        %v491 = vsub.f32 %v489, %v490
        %v492 = vand.u32 %v491, 4294901760
        %493 = vmatprep.subr.mxu0 %v492
        %v494 = vand.u32 %v274, 4294901760
        %v495 = vsub.f32 %v274, %v494
        %v496 = vand.u32 %v495, 4294901760
        %v497 = vsub.f32 %v495, %v496
        %v498 = vand.u32 %v497, 4294901760
        %499 = vmatpush1.msra.mxu0 %v498
        %v500 = vand.u32 %v277, 4294901760
        %v501 = vsub.f32 %v277, %v500
        %v502 = vand.u32 %v501, 4294901760
        %v503 = vsub.f32 %v501, %v502
        %v504 = vand.u32 %v503, 4294901760
        %505 = vmatprep.subr.mxu0 %v504
        %v506 = vand.u32 %v276, 4294901760
        %v507 = vsub.f32 %v276, %v506
        %v508 = vand.u32 %v507, 4294901760
        %v509 = vsub.f32 %v507, %v508
        %v510 = vand.u32 %v509, 4294901760
        %511 = vmatpush1.msra.mxu0 %v510
        %512 = vmatprep.subr.mxu0 0.0
        %513 = vmatpush1.msra.mxu0 0.0
        %514 = vmatprep.subr.mxu0 0.0
        %515 = vmatpush1.msra.mxu0 0.0
        %516 = vmatprep.subr.mxu0 0.0
        %517 = vmatpush1.msra.mxu0 0.0
        %518 = vmatprep.subr.mxu0 0.0
        %519 = vmatpush1.msra.mxu0 0.0
        %520 = vmatprep.subr.mxu0 0.0
        %521 = vmatpush1.msra.mxu0 0.0
        %522 = vmatprep.subr.mxu0 0.0
        %523 = vmatpush1.msra.mxu0 0.0
        %524 = vmatprep.subr.mxu0 0.0
        %525 = vmatpush1.msra.mxu0 0.0
        %526 = vmatprep.subr.mxu0 0.0
        %527 = vmatpush1.msra.mxu0 0.0
        %528 = vmatprep.subr.mxu0 0.0
        %529 = vmatpush1.msra.mxu0 0.0
        %530 = vmatprep.subr.mxu0 0.0
        %531 = vmatpush1.msra.mxu0 0.0
        %532 = vmatprep.subr.mxu0 0.0
        %533 = vmatpush1.msra.mxu0 0.0
        %534 = vmatprep.subr.mxu0 0.0
        %535 = vmatpush1.msra.mxu0 0.0
        %536 = vmatprep.subr.mxu0 0.0
        %537 = vmatpush1.msra.mxu0 0.0
        %538 = vmatprep.subr.mxu0 0.0
        %539 = vmatpush1.msra.mxu0 0.0
        %540 = vmatprep.subr.mxu0 0.0
        %541 = vmatpush1.msra.mxu0 0.0
        %542 = vmatprep.subr.mxu0 0.0
        %543 = vmatpush1.msra.mxu0 0.0
        %544 = vmatprep.subr.mxu0 0.0
        %545 = vmatpush1.msra.mxu0 0.0
        %546 = vmatprep.subr.mxu0 0.0
        %547 = vmatpush1.msra.mxu0 0.0
        %548 = vmatprep.subr.mxu0 0.0
        %549 = vmatpush1.msra.mxu0 0.0
        %550 = vmatprep.subr.mxu0 0.0
        %551 = vmatpush1.msra.mxu0 0.0
        %552 = vmatprep.subr.mxu0 0.0
        %553 = vmatpush1.msra.mxu0 0.0
        %554 = vmatprep.subr.mxu0 0.0
        %555 = vmatpush1.msra.mxu0 0.0
        %556 = vmatprep.subr.mxu0 0.0
        %557 = vmatpush1.msra.mxu0 0.0
        %558 = vmatprep.subr.mxu0 0.0
        %559 = vmatpush1.msra.mxu0 0.0
        %560 = vmatprep.subr.mxu0 0.0
        %561 = vmatpush1.msra.mxu0 0.0
        %562 = vmatprep.subr.mxu0 0.0
        %563 = vmatpush1.msra.mxu0 0.0
        %564 = vmatprep.subr.mxu0 0.0
        %565 = vmatpush1.msra.mxu0 0.0
        %566 = vmatprep.subr.mxu0 0.0
        %567 = vmatpush1.msra.mxu0 0.0
        %568 = vmatprep.mubr.f32.mxu0 0.0
        %v569 = vand.u32 %v378, 4294901760
        %570 = vmatmul.mubr.f32.gmra.mrb[0].mxu0 %v569
        %v571 = vpop.f32.mrb[0].mxu0
        %v572 = vadd.f32 %v460, %v571
        %v573 = vpop.f32.mrb[0].mxu0
        %v574 = vadd.f32 %v462, %v573
        %575 = vdwg.mxu0
        %v576 = vand.u32 %v271, 4294901760
        %v577 = vsub.f32 %v271, %v576
        %578 = vmatprep.subr.mxu0 %v577
        %v579 = vand.u32 %v270, 4294901760
        %v580 = vsub.f32 %v270, %v579
        %581 = vmatpush1.msra.mxu0 %v580
        %v582 = vand.u32 %v273, 4294901760
        %v583 = vsub.f32 %v273, %v582
        %584 = vmatprep.subr.mxu0 %v583
        %v585 = vand.u32 %v272, 4294901760
        %v586 = vsub.f32 %v272, %v585
        %587 = vmatpush1.msra.mxu0 %v586
        %v588 = vand.u32 %v275, 4294901760
        %v589 = vsub.f32 %v275, %v588
        %590 = vmatprep.subr.mxu0 %v589
        %v591 = vand.u32 %v274, 4294901760
        %v592 = vsub.f32 %v274, %v591
        %593 = vmatpush1.msra.mxu0 %v592
        %v594 = vand.u32 %v277, 4294901760
        %v595 = vsub.f32 %v277, %v594
        %596 = vmatprep.subr.mxu0 %v595
        %v597 = vand.u32 %v276, 4294901760
        %v598 = vsub.f32 %v276, %v597
        %599 = vmatpush1.msra.mxu0 %v598
        %600 = vmatprep.subr.mxu0 0.0
        %601 = vmatpush1.msra.mxu0 0.0
        %602 = vmatprep.subr.mxu0 0.0
        %603 = vmatpush1.msra.mxu0 0.0
        %604 = vmatprep.subr.mxu0 0.0
        %605 = vmatpush1.msra.mxu0 0.0
        %606 = vmatprep.subr.mxu0 0.0
        %607 = vmatpush1.msra.mxu0 0.0
        %608 = vmatprep.subr.mxu0 0.0
        %609 = vmatpush1.msra.mxu0 0.0
        %610 = vmatprep.subr.mxu0 0.0
        %611 = vmatpush1.msra.mxu0 0.0
        %612 = vmatprep.subr.mxu0 0.0
        %613 = vmatpush1.msra.mxu0 0.0
        %614 = vmatprep.subr.mxu0 0.0
        %615 = vmatpush1.msra.mxu0 0.0
        %616 = vmatprep.subr.mxu0 0.0
        %617 = vmatpush1.msra.mxu0 0.0
        %618 = vmatprep.subr.mxu0 0.0
        %619 = vmatpush1.msra.mxu0 0.0
        %620 = vmatprep.subr.mxu0 0.0
        %621 = vmatpush1.msra.mxu0 0.0
        %622 = vmatprep.subr.mxu0 0.0
        %623 = vmatpush1.msra.mxu0 0.0
        %624 = vmatprep.subr.mxu0 0.0
        %625 = vmatpush1.msra.mxu0 0.0
        %626 = vmatprep.subr.mxu0 0.0
        %627 = vmatpush1.msra.mxu0 0.0
        %628 = vmatprep.subr.mxu0 0.0
        %629 = vmatpush1.msra.mxu0 0.0
        %630 = vmatprep.subr.mxu0 0.0
        %631 = vmatpush1.msra.mxu0 0.0
        %632 = vmatprep.subr.mxu0 0.0
        %633 = vmatpush1.msra.mxu0 0.0
        %634 = vmatprep.subr.mxu0 0.0
        %635 = vmatpush1.msra.mxu0 0.0
        %636 = vmatprep.subr.mxu0 0.0
        %637 = vmatpush1.msra.mxu0 0.0
        %638 = vmatprep.subr.mxu0 0.0
        %639 = vmatpush1.msra.mxu0 0.0
        %640 = vmatprep.subr.mxu0 0.0
        %641 = vmatpush1.msra.mxu0 0.0
        %642 = vmatprep.subr.mxu0 0.0
        %643 = vmatpush1.msra.mxu0 0.0
        %644 = vmatprep.subr.mxu0 0.0
        %645 = vmatpush1.msra.mxu0 0.0
        %646 = vmatprep.subr.mxu0 0.0
        %647 = vmatpush1.msra.mxu0 0.0
        %648 = vmatprep.subr.mxu0 0.0
        %649 = vmatpush1.msra.mxu0 0.0
        %650 = vmatprep.subr.mxu0 0.0
        %651 = vmatpush1.msra.mxu0 0.0
        %652 = vmatprep.subr.mxu0 0.0
        %653 = vmatpush1.msra.mxu0 0.0
        %654 = vmatprep.subr.mxu0 0.0
        %655 = vmatpush1.msra.mxu0 0.0
        %656 = vmatprep.mubr.f32.mxu0 0.0
        %v657 = vand.u32 %v378, 4294901760
        %v658 = vsub.f32 %v378, %v657
        %659 = vmatmul.mubr.f32.gmra.mrb[0].mxu0 %v658
        %v660 = vpop.f32.mrb[0].mxu0
        %v661 = vadd.f32 %v572, %v660
        %v662 = vpop.f32.mrb[0].mxu0
        %v663 = vadd.f32 %v574, %v662
        %664 = vdwg.mxu0
        %v665 = vand.u32 %v271, 4294901760
        %666 = vmatprep.subr.mxu0 %v665
        %v667 = vand.u32 %v270, 4294901760
        %668 = vmatpush1.msra.mxu0 %v667
        %v669 = vand.u32 %v273, 4294901760
        %670 = vmatprep.subr.mxu0 %v669
        %v671 = vand.u32 %v272, 4294901760
        %672 = vmatpush1.msra.mxu0 %v671
        %v673 = vand.u32 %v275, 4294901760
        %674 = vmatprep.subr.mxu0 %v673
        %v675 = vand.u32 %v274, 4294901760
        %676 = vmatpush1.msra.mxu0 %v675
        %v677 = vand.u32 %v277, 4294901760
        %678 = vmatprep.subr.mxu0 %v677
        %v679 = vand.u32 %v276, 4294901760
        %680 = vmatpush1.msra.mxu0 %v679
        %681 = vmatprep.subr.mxu0 0.0
        %682 = vmatpush1.msra.mxu0 0.0
        %683 = vmatprep.subr.mxu0 0.0
        %684 = vmatpush1.msra.mxu0 0.0
        %685 = vmatprep.subr.mxu0 0.0
        %686 = vmatpush1.msra.mxu0 0.0
        %687 = vmatprep.subr.mxu0 0.0
        %688 = vmatpush1.msra.mxu0 0.0
        %689 = vmatprep.subr.mxu0 0.0
        %690 = vmatpush1.msra.mxu0 0.0
        %691 = vmatprep.subr.mxu0 0.0
        %692 = vmatpush1.msra.mxu0 0.0
        %693 = vmatprep.subr.mxu0 0.0
        %694 = vmatpush1.msra.mxu0 0.0
        %695 = vmatprep.subr.mxu0 0.0
        %696 = vmatpush1.msra.mxu0 0.0
        %697 = vmatprep.subr.mxu0 0.0
        %698 = vmatpush1.msra.mxu0 0.0
        %699 = vmatprep.subr.mxu0 0.0
        %700 = vmatpush1.msra.mxu0 0.0
        %701 = vmatprep.subr.mxu0 0.0
        %702 = vmatpush1.msra.mxu0 0.0
        %703 = vmatprep.subr.mxu0 0.0
        %704 = vmatpush1.msra.mxu0 0.0
        %705 = vmatprep.subr.mxu0 0.0
        %706 = vmatpush1.msra.mxu0 0.0
        %707 = vmatprep.subr.mxu0 0.0
        %708 = vmatpush1.msra.mxu0 0.0
        %709 = vmatprep.subr.mxu0 0.0
        %710 = vmatpush1.msra.mxu0 0.0
        %711 = vmatprep.subr.mxu0 0.0
        %712 = vmatpush1.msra.mxu0 0.0
        %713 = vmatprep.subr.mxu0 0.0
        %714 = vmatpush1.msra.mxu0 0.0
        %715 = vmatprep.subr.mxu0 0.0
        %716 = vmatpush1.msra.mxu0 0.0
        %717 = vmatprep.subr.mxu0 0.0
        %718 = vmatpush1.msra.mxu0 0.0
        %719 = vmatprep.subr.mxu0 0.0
        %720 = vmatpush1.msra.mxu0 0.0
        %721 = vmatprep.subr.mxu0 0.0
        %722 = vmatpush1.msra.mxu0 0.0
        %723 = vmatprep.subr.mxu0 0.0
        %724 = vmatpush1.msra.mxu0 0.0
        %725 = vmatprep.subr.mxu0 0.0
        %726 = vmatpush1.msra.mxu0 0.0
        %727 = vmatprep.subr.mxu0 0.0
        %728 = vmatpush1.msra.mxu0 0.0
        %729 = vmatprep.subr.mxu0 0.0
        %730 = vmatpush1.msra.mxu0 0.0
        %731 = vmatprep.subr.mxu0 0.0
        %732 = vmatpush1.msra.mxu0 0.0
        %733 = vmatprep.subr.mxu0 0.0
        %734 = vmatpush1.msra.mxu0 0.0
        %735 = vmatprep.subr.mxu0 0.0
        %736 = vmatpush1.msra.mxu0 0.0
        %737 = vmatprep.mubr.f32.mxu0 0.0
        %v738 = vand.u32 %v378, 4294901760
        %v739 = vsub.f32 %v378, %v738
        %v740 = vand.u32 %v739, 4294901760
        %741 = vmatmul.mubr.f32.gmra.mrb[0].mxu0 %v740
        %v742 = vpop.f32.mrb[0].mxu0
        %v743 = vadd.f32 %v661, %v742
        %v744 = vpop.f32.mrb[0].mxu0
        %v745 = vadd.f32 %v663, %v744
        %746 = vdwg.mxu0
        %v747 = vand.u32 %v271, 4294901760
        %v748 = vsub.f32 %v271, %v747
        %v749 = vand.u32 %v748, 4294901760
        %750 = vmatprep.subr.mxu0 %v749
        %v751 = vand.u32 %v270, 4294901760
        %v752 = vsub.f32 %v270, %v751
        %v753 = vand.u32 %v752, 4294901760
        %754 = vmatpush1.msra.mxu0 %v753
        %v755 = vand.u32 %v273, 4294901760
        %v756 = vsub.f32 %v273, %v755
        %v757 = vand.u32 %v756, 4294901760
        %758 = vmatprep.subr.mxu0 %v757
        %v759 = vand.u32 %v272, 4294901760
        %v760 = vsub.f32 %v272, %v759
        %v761 = vand.u32 %v760, 4294901760
        %762 = vmatpush1.msra.mxu0 %v761
        %v763 = vand.u32 %v275, 4294901760
        %v764 = vsub.f32 %v275, %v763
        %v765 = vand.u32 %v764, 4294901760
        %766 = vmatprep.subr.mxu0 %v765
        %v767 = vand.u32 %v274, 4294901760
        %v768 = vsub.f32 %v274, %v767
        %v769 = vand.u32 %v768, 4294901760
        %770 = vmatpush1.msra.mxu0 %v769
        %v771 = vand.u32 %v277, 4294901760
        %v772 = vsub.f32 %v277, %v771
        %v773 = vand.u32 %v772, 4294901760
        %774 = vmatprep.subr.mxu0 %v773
        %v775 = vand.u32 %v276, 4294901760
        %v776 = vsub.f32 %v276, %v775
        %v777 = vand.u32 %v776, 4294901760
        %778 = vmatpush1.msra.mxu0 %v777
        %779 = vmatprep.subr.mxu0 0.0
        %780 = vmatpush1.msra.mxu0 0.0
        %781 = vmatprep.subr.mxu0 0.0
        %782 = vmatpush1.msra.mxu0 0.0
        %783 = vmatprep.subr.mxu0 0.0
        %784 = vmatpush1.msra.mxu0 0.0
        %785 = vmatprep.subr.mxu0 0.0
        %786 = vmatpush1.msra.mxu0 0.0
        %787 = vmatprep.subr.mxu0 0.0
        %788 = vmatpush1.msra.mxu0 0.0
        %789 = vmatprep.subr.mxu0 0.0
        %790 = vmatpush1.msra.mxu0 0.0
        %791 = vmatprep.subr.mxu0 0.0
        %792 = vmatpush1.msra.mxu0 0.0
        %793 = vmatprep.subr.mxu0 0.0
        %794 = vmatpush1.msra.mxu0 0.0
        %795 = vmatprep.subr.mxu0 0.0
        %796 = vmatpush1.msra.mxu0 0.0
        %797 = vmatprep.subr.mxu0 0.0
        %798 = vmatpush1.msra.mxu0 0.0
        %799 = vmatprep.subr.mxu0 0.0
        %800 = vmatpush1.msra.mxu0 0.0
        %801 = vmatprep.subr.mxu0 0.0
        %802 = vmatpush1.msra.mxu0 0.0
        %803 = vmatprep.subr.mxu0 0.0
        %804 = vmatpush1.msra.mxu0 0.0
        %805 = vmatprep.subr.mxu0 0.0
        %806 = vmatpush1.msra.mxu0 0.0
        %807 = vmatprep.subr.mxu0 0.0
        %808 = vmatpush1.msra.mxu0 0.0
        %809 = vmatprep.subr.mxu0 0.0
        %810 = vmatpush1.msra.mxu0 0.0
        %811 = vmatprep.subr.mxu0 0.0
        %812 = vmatpush1.msra.mxu0 0.0
        %813 = vmatprep.subr.mxu0 0.0
        %814 = vmatpush1.msra.mxu0 0.0
        %815 = vmatprep.subr.mxu0 0.0
        %816 = vmatpush1.msra.mxu0 0.0
        %817 = vmatprep.subr.mxu0 0.0
        %818 = vmatpush1.msra.mxu0 0.0
        %819 = vmatprep.subr.mxu0 0.0
        %820 = vmatpush1.msra.mxu0 0.0
        %821 = vmatprep.subr.mxu0 0.0
        %822 = vmatpush1.msra.mxu0 0.0
        %823 = vmatprep.subr.mxu0 0.0
        %824 = vmatpush1.msra.mxu0 0.0
        %825 = vmatprep.subr.mxu0 0.0
        %826 = vmatpush1.msra.mxu0 0.0
        %827 = vmatprep.subr.mxu0 0.0
        %828 = vmatpush1.msra.mxu0 0.0
        %829 = vmatprep.subr.mxu0 0.0
        %830 = vmatpush1.msra.mxu0 0.0
        %831 = vmatprep.subr.mxu0 0.0
        %832 = vmatpush1.msra.mxu0 0.0
        %833 = vmatprep.subr.mxu0 0.0
        %834 = vmatpush1.msra.mxu0 0.0
        %835 = vmatprep.mubr.f32.mxu0 0.0
        %v836 = vand.u32 %v378, 4294901760
        %837 = vmatmul.mubr.f32.gmra.mrb[0].mxu0 %v836
        %v838 = vpop.f32.mrb[0].mxu0
        %v839 = vadd.f32 %v743, %v838
        %v840 = vpop.f32.mrb[0].mxu0
        %v841 = vadd.f32 %v745, %v840
        %842 = vdwg.mxu0
        %v843 = vand.u32 %v271, 4294901760
        %844 = vmatprep.subr.mxu0 %v843
        %v845 = vand.u32 %v270, 4294901760
        %846 = vmatpush1.msra.mxu0 %v845
        %v847 = vand.u32 %v273, 4294901760
        %848 = vmatprep.subr.mxu0 %v847
        %v849 = vand.u32 %v272, 4294901760
        %850 = vmatpush1.msra.mxu0 %v849
        %v851 = vand.u32 %v275, 4294901760
        %852 = vmatprep.subr.mxu0 %v851
        %v853 = vand.u32 %v274, 4294901760
        %854 = vmatpush1.msra.mxu0 %v853
        %v855 = vand.u32 %v277, 4294901760
        %856 = vmatprep.subr.mxu0 %v855
        %v857 = vand.u32 %v276, 4294901760
        %858 = vmatpush1.msra.mxu0 %v857
        %859 = vmatprep.subr.mxu0 0.0
        %860 = vmatpush1.msra.mxu0 0.0
        %861 = vmatprep.subr.mxu0 0.0
        %862 = vmatpush1.msra.mxu0 0.0
        %863 = vmatprep.subr.mxu0 0.0
        %864 = vmatpush1.msra.mxu0 0.0
        %865 = vmatprep.subr.mxu0 0.0
        %866 = vmatpush1.msra.mxu0 0.0
        %867 = vmatprep.subr.mxu0 0.0
        %868 = vmatpush1.msra.mxu0 0.0
        %869 = vmatprep.subr.mxu0 0.0
        %870 = vmatpush1.msra.mxu0 0.0
        %871 = vmatprep.subr.mxu0 0.0
        %872 = vmatpush1.msra.mxu0 0.0
        %873 = vmatprep.subr.mxu0 0.0
        %874 = vmatpush1.msra.mxu0 0.0
        %875 = vmatprep.subr.mxu0 0.0
        %876 = vmatpush1.msra.mxu0 0.0
        %877 = vmatprep.subr.mxu0 0.0
        %878 = vmatpush1.msra.mxu0 0.0
        %879 = vmatprep.subr.mxu0 0.0
        %880 = vmatpush1.msra.mxu0 0.0
        %881 = vmatprep.subr.mxu0 0.0
        %882 = vmatpush1.msra.mxu0 0.0
        %883 = vmatprep.subr.mxu0 0.0
        %884 = vmatpush1.msra.mxu0 0.0
        %885 = vmatprep.subr.mxu0 0.0
        %886 = vmatpush1.msra.mxu0 0.0
        %887 = vmatprep.subr.mxu0 0.0
        %888 = vmatpush1.msra.mxu0 0.0
        %889 = vmatprep.subr.mxu0 0.0
        %890 = vmatpush1.msra.mxu0 0.0
        %891 = vmatprep.subr.mxu0 0.0
        %892 = vmatpush1.msra.mxu0 0.0
        %893 = vmatprep.subr.mxu0 0.0
        %894 = vmatpush1.msra.mxu0 0.0
        %895 = vmatprep.subr.mxu0 0.0
        %896 = vmatpush1.msra.mxu0 0.0
        %897 = vmatprep.subr.mxu0 0.0
        %898 = vmatpush1.msra.mxu0 0.0
        %899 = vmatprep.subr.mxu0 0.0
        %900 = vmatpush1.msra.mxu0 0.0
        %901 = vmatprep.subr.mxu0 0.0
        %902 = vmatpush1.msra.mxu0 0.0
        %903 = vmatprep.subr.mxu0 0.0
        %904 = vmatpush1.msra.mxu0 0.0
        %905 = vmatprep.subr.mxu0 0.0
        %906 = vmatpush1.msra.mxu0 0.0
        %907 = vmatprep.subr.mxu0 0.0
        %908 = vmatpush1.msra.mxu0 0.0
        %909 = vmatprep.subr.mxu0 0.0
        %910 = vmatpush1.msra.mxu0 0.0
        %911 = vmatprep.subr.mxu0 0.0
        %912 = vmatpush1.msra.mxu0 0.0
        %913 = vmatprep.subr.mxu0 0.0
        %914 = vmatpush1.msra.mxu0 0.0
        %915 = vmatprep.mubr.f32.mxu0 0.0
        %v916 = vand.u32 %v378, 4294901760
        %917 = vmatmul.mubr.f32.gmra.mrb[0].mxu0 %v916
        %v918 = vpop.f32.mrb[0].mxu0
        %v919 = vadd.f32 %v839, %v918
        %v920 = vpop.f32.mrb[0].mxu0
        %v921 = vadd.f32 %v841, %v920
        %922 = vdwg.mxu0
        %v923 = vxor.u32 %v919, 2147483648
        %v924 = vxor.u32 %v921, 2147483648
        %v925 = vmul.f32 %v923, 1.442695
        %v926 = vpow.pop %v925
        %v927 = vmul.f32 %v924, 1.442695
        %v928 = vpow.pop %v927
        %v929 = vadd.f32 %v926, 1.0
        %v930 = vadd.f32 %v928, 1.0
        %v931 = vrcp.pop %v929
        %v932 = vmul.f32 1.0, %v931
        %v933 = vrcp.pop %v930
        %v934 = vmul.f32 1.0, %v933
        %936 = vset.pattern.permute.xlu0 0
        %937 = vperm.xlu0 %936, %v368
        %v938 = vpop.permute.xlu0 %937
        %941 = vset.pattern.permute.xlu0 0
        %942 = vperm.xlu0 %941, %v370
        %v943 = vpop.permute.xlu0 %942
        %946 = vset.pattern.permute.xlu0 0
        %947 = vperm.xlu0 %946, %v372
        %v948 = vpop.permute.xlu0 %947
        %951 = vset.pattern.permute.xlu0 0
        %952 = vperm.xlu0 %951, %v374
        %v953 = vpop.permute.xlu0 %952
        %v955 = vlaneseq
        %v956 = vshrl.u32 %v955, 7
        %v957 = vsub.s32 0, %v956
        %v958 = vrot.slane %v932, %v957
        %v959 = vlaneseq
        %v960 = vshrl.u32 %v959, 7
        %v961 = vsub.s32 0, %v960
        %v962 = vrot.slane %v934, %v961
        %v963 = vadd.f32 %v938, %v958
        %v964 = vadd.f32 %v938, %v962
        %v965 = vadd.f32 %v943, %v958
        %v966 = vadd.f32 %v943, %v962
        %v967 = vadd.f32 %v948, %v958
        %v968 = vadd.f32 %v948, %v962
        %v969 = vadd.f32 %v953, %v958
        %v970 = vadd.f32 %v953, %v962
        %v971 = vmul.f32 %v270, %v963
        %v972 = vmul.f32 %v271, %v964
        %v973 = vmul.f32 %v272, %v965
        %v974 = vmul.f32 %v273, %v966
        %v975 = vmul.f32 %v274, %v967
        %v976 = vmul.f32 %v275, %v968
        %v977 = vmul.f32 %v276, %v969
        %v978 = vmul.f32 %v277, %v970
        %979 = vst [vmem:[%s269] sm:$0xff] %v971
        %980 = vst [vmem:[%s269 + $0x8] sm:$0xff] %v972
        %981 = vst [vmem:[%s269 + $0x10] sm:$0xff] %v973
        %982 = vst [vmem:[%s269 + $0x18] sm:$0xff] %v974
        %983 = vst [vmem:[%s269 + $0x20] sm:$0xff] %v975
        %984 = vst [vmem:[%s269 + $0x28] sm:$0xff] %v976
        %985 = vst [vmem:[%s269 + $0x30] sm:$0xff] %v977
        %986 = vst [vmem:[%s269 + $0x38] sm:$0xff] %v978
        %s987 = sand.u32 %s162, 1
        %s988 = scalar_lea.sflag [#allocation4], %s987
        %s989 = sand.u32 %s162, 1
        %s990 = smul.addr %s989, 64
        %s991 = scalar_lea.vmem [#allocation5], %s990
        // Predicated region
        $region49: #{tpu_custom_call.1} parent=43 // pred_check
          %p992 = pneg %p172
        $region50: #{tpu_custom_call.1} parent=43 // pred_check_branch
          %994 = sbr.rel (%p992) target = $region52
        $region51: #{tpu_custom_call.1} parent=43 // pred_region
          %s996 = ssub.s32 1024, 1024
          %997 = vsyncadd %s988, %s996
          %s998 = smul.addr %s23, 8
          %s999 = smul.addr %s998, 128
          %s1000 = scalar_lea.hbm %s6, %s999
          %s1001 = sshll.u32 %s991, 4
          %s1002 = int_to_ptr.vmem [resolvable:$true] %s1001
          %1007 = dma.vmem_to_hbm [thread:$0]  %s1002, 1024, %s1000, %s988, 256, 256, 16
        $region52: #{tpu_custom_call.1} parent=43 // pred_fallthru
          _
      $region44: #{tpu_custom_call.1} parent=5 // pred_fallthru
        _
      %p1008 = scmp.le.s32.totalorder 2, %s18
      // Predicated region
      $region53: #{tpu_custom_call.1} parent=5 // pred_check
        %p1009 = pneg %p1008
      $region54: #{tpu_custom_call.1} parent=5 // pred_check_branch
        %1011 = sbr.rel (%p1009) target = $region56
      $region55: #{tpu_custom_call.1} parent=5 // pred_region
        %s1012 = ssub.s32 %s18, 2
        // Predicated region
        $region57: #{tpu_custom_call.1} parent=55 // pred_check
          %p1013 = pneg %p178
        $region58: #{tpu_custom_call.1} parent=55 // pred_check_branch
          %1015 = sbr.rel (%p1013) target = $region60
        $region59: #{tpu_custom_call.1} parent=55 // pred_region
          %s1016 = sand.u32 %s163, 1
          %s1017 = scalar_lea.sflag [#allocation4], %s1016
          %s1018 = sand.u32 %s163, 1
          %s1019 = smul.addr %s1018, 64
          %s1020 = scalar_lea.vmem [#allocation5], %s1019
          %1021 = dma.done %s1017, 1024
        $region60: #{tpu_custom_call.1} parent=55 // pred_fallthru
          _
      $region56: #{tpu_custom_call.1} parent=5 // pred_fallthru
        _
    $region6: #{tpu_custom_call.1} parent=1 // loop_footer
      %s22 = sadd.s32 1, %s18
    $region7: #{tpu_custom_call.1} parent=1 // loop_footer_branch
      %17 = sbr.rel target = $region3
    $region8: #{tpu_custom_call.1} parent=1 // loop_exit
      _
    %1022 = vsyncpa [#allocation3], 1
    %s1023 = scalar_lea.sflag [#allocation3], 1
    %1024 = vsyncpa %s1023, 1
    %1025 = vsyncpa [#allocation4], 1
    %s1026 = scalar_lea.sflag [#allocation4], 1
    %1027 = vsyncpa %s1026, 1

</llo_original>
